<compile_context>
chip_gen: v7x
topology: tpu7x:2x2x1
jax: 0.10.0
libtpu: 0.0.40
codegen_flags: <defaults>
</compile_context>

<pallas_src>
import jax
import jax.numpy as jnp
from jax.experimental import pallas as pl
from jax.experimental.pallas import tpu as pltpu


_LANE = 128
_VMEM_LIMIT_BYTES = 32 * 1024 * 1024      # safe on v5e/v6e/v7x
_TARGET_TILE_BYTES = 2 * 1024 * 1024      # per single x tile (before 2x buffering)


# ---------------------------------------------------------------------------
# Kernels
# ---------------------------------------------------------------------------
def _bn_stats_kernel(x_ref, sum_ref, sumsq_ref):
    """Accumulate per-channel sum and sum-of-squares over the whole grid.

    x_ref:              (1, C, T) tile of the (N, C, HWp) input
    sum_ref, sumsq_ref: (C, 1) f32 accumulators, resident across all grid steps
    """
    @pl.when((pl.program_id(0) == 0) & (pl.program_id(1) == 0))
    def _():
        sum_ref[...] = jnp.zeros_like(sum_ref)
        sumsq_ref[...] = jnp.zeros_like(sumsq_ref)

    x = x_ref[0].astype(jnp.float32)                     # (C, T)
    sum_ref[...] += jnp.sum(x, axis=1, keepdims=True)
    sumsq_ref[...] += jnp.sum(x * x, axis=1, keepdims=True)


def _bn_scale_shift_kernel(x_ref, scale_ref, shift_ref, y_ref):
    """y = x * scale + shift  (one FMA per element; scale/shift are (C,1))."""
    x = x_ref[0].astype(jnp.float32)                     # (C, T)
    y = x * scale_ref[...] + shift_ref[...]
    y_ref[0] = y.astype(y_ref.dtype)


# ---------------------------------------------------------------------------
# Tiling helpers
# ---------------------------------------------------------------------------
def _choose_tile(hw: int, c: int) -> int:
    """Largest lane tile (multiple of 128) within the per-buffer VMEM budget."""
    by_vmem = max(_LANE, (_TARGET_TILE_BYTES // (max(c, 1) * 4)) // _LANE * _LANE)
    by_hw = pl.cdiv(hw, _LANE) * _LANE
    return max(_LANE, min(4096, by_vmem, by_hw))


def _batch_stats(x3, tile):
    """Per-channel (sum, sum_of_squares) over axes (N, HW) of x3=(N,C,HWp)."""
    N, C, HWp = x3.shape
    grid = (N, HWp // tile)
    return pl.pallas_call(
        _bn_stats_kernel,
        out_shape=(jax.ShapeDtypeStruct((C, 1), jnp.float32),
                   jax.ShapeDtypeStruct((C, 1), jnp.float32)),
        grid=grid,
        in_specs=[pl.BlockSpec((1, C, tile), lambda n, i: (n, 0, i))],
        out_specs=(pl.BlockSpec((C, 1), lambda n, i: (0, 0)),
                   pl.BlockSpec((C, 1), lambda n, i: (0, 0))),
        compiler_params=pltpu.CompilerParams(
            dimension_semantics=("arbitrary", "arbitrary"),
            vmem_limit_bytes=_VMEM_LIMIT_BYTES),
    )(x3)


def _normalize(x3, scale, shift, tile, out_dtype):
    """Tiled y = x*scale + shift over x3=(N,C,HWp); scale/shift are (C,1) f32."""
    N, C, HWp = x3.shape
    grid = (N, HWp // tile)
    return pl.pallas_call(
        _bn_scale_shift_kernel,
        out_shape=jax.ShapeDtypeStruct((N, C, HWp), out_dtype),
        grid=grid,
        in_specs=[
            pl.BlockSpec((1, C, tile), lambda n, i: (n, 0, i)),
            pl.BlockSpec((C, 1), lambda n, i: (0, 0)),   # resident per-channel scale
            pl.BlockSpec((C, 1), lambda n, i: (0, 0)),   # resident per-channel shift
        ],
        out_specs=pl.BlockSpec((1, C, tile), lambda n, i: (n, 0, i)),
        compiler_params=pltpu.CompilerParams(
            dimension_semantics=("parallel", "parallel"),
            vmem_limit_bytes=_VMEM_LIMIT_BYTES),
    )(x3, scale, shift)


# ---------------------------------------------------------------------------
# Wrapper (mirrors BatchNorm2d.forward semantics)
# ---------------------------------------------------------------------------
def batchnorm2d_forward(
    x,                     # (N, C, H, W)
    weight,                # (C,)
    bias,                  # (C,)
    running_mean,          # (C,)
    running_var,           # (C,)
    num_batches_tracked,   # (1,)
    *,
    eps: float = 1e-5,
    momentum: float = 0.1,
    training: bool = True,
):
    """Returns (y, new_running_mean, new_running_var, new_num_batches_tracked)."""
    N, C, H, W = x.shape
    HW = H * W
    tile = _choose_tile(HW, C)
    HWp = pl.cdiv(HW, tile) * tile

    x3 = x.reshape(N, C, HW)                 # free reshape: no transpose, no copy
    if HWp != HW:
        # zero-pad the lane axis to a tile multiple; zeros add nothing to
        # sum/sumsq, and we divide by the true element count below.
        x3 = jnp.pad(x3, ((0, 0), (0, 0), (0, HWp - HW)))

    if training:
        s, sq = _batch_stats(x3, tile)
        count = float(N * HW)
        mean = s.reshape(C) / count
        # biased variance (torch.var(..., unbiased=False)), clamped against
        # tiny negative values from E[x^2] - mean^2 cancellation in f32.
        var = jnp.maximum(sq.reshape(C) / count - mean * mean, 0.0)
        # The reference module updates running stats with the *biased* var.
        new_running_mean = (1.0 - momentum) * running_mean + momentum * mean
        new_running_var = (1.0 - momentum) * running_var + momentum * var
        new_num_batches_tracked = num_batches_tracked + 1
    else:
        mean = running_mean.astype(jnp.float32)
        var = running_var.astype(jnp.float32)
        new_running_mean = running_mean
        new_running_var = running_var
        new_num_batches_tracked = num_batches_tracked

    # Fold normalization + affine into per-channel scale/shift (computed once).
    scale_c = weight.astype(jnp.float32) * jax.lax.rsqrt(var + eps)    # (C,)
    shift_c = bias.astype(jnp.float32) - mean * scale_c                # (C,)

    y3 = _normalize(x3, scale_c.reshape(C, 1), shift_c.reshape(C, 1), tile, x.dtype)
    y = y3[:, :, :HW].reshape(N, C, H, W)
    return y, new_running_mean, new_running_var, new_num_batches_tracked


# ---------------------------------------------------------------------------
# Pure-JAX reference (for correctness check)
# ---------------------------------------------------------------------------
def _reference(x, weight, bias, running_mean, running_var, eps, training):
    if training:
        mean = jnp.mean(x, axis=(0, 2, 3), keepdims=True)
        var = jnp.var(x, axis=(0, 2, 3), keepdims=True)  # unbiased=False
    else:
        mean = running_mean.reshape(1, -1, 1, 1)
        var = running_var.reshape(1, -1, 1, 1)
    w = weight.reshape(1, -1, 1, 1)
    b = bias.reshape(1, -1, 1, 1)
    return (x - mean) / jnp.sqrt(var + eps) * w + b


if __name__ == "__main__":
    key = jax.random.PRNGKey(0)
    kx, kw, kb = jax.random.split(key, 3)

    N, C, H, W = 2, 4, 16, 16
    eps, momentum = 1e-5, 0.1

    x = jax.random.normal(kx, (N, C, H, W), dtype=jnp.float32) * 2.0 + 0.5
    weight = jax.random.normal(kw, (C,), dtype=jnp.float32) + 1.0
    bias = jax.random.normal(kb, (C,), dtype=jnp.float32) * 0.1
    running_mean = jnp.zeros((C,), dtype=jnp.float32)
    running_var = jnp.ones((C,), dtype=jnp.float32)
    num_batches_tracked = jnp.zeros((1,), dtype=jnp.float32)

    # --- training mode ---
    y_tr, rm, rv, nbt = batchnorm2d_forward(
        x, weight, bias, running_mean, running_var, num_batches_tracked,
        eps=eps, momentum=momentum, training=True,
    )
    jax.block_until_ready(y_tr)
    ref_tr = _reference(x, weight, bias, running_mean, running_var, eps, True)
    assert jnp.allclose(y_tr, ref_tr, atol=1e-4, rtol=1e-4)
    batch_mean = jnp.mean(x, axis=(0, 2, 3))
    batch_var = jnp.var(x, axis=(0, 2, 3))
    assert jnp.allclose(rm, (1 - momentum) * running_mean + momentum * batch_mean, atol=1e-5)
    assert jnp.allclose(rv, (1 - momentum) * running_var + momentum * batch_var, atol=1e-4)
    assert jnp.allclose(nbt, jnp.ones((1,)))

    # --- eval mode (uses updated running stats) ---
    y_ev, _, _, _ = batchnorm2d_forward(
        x, weight, bias, rm, rv, nbt,
        eps=eps, momentum=momentum, training=False,
    )
    jax.block_until_ready(y_ev)
    ref_ev = _reference(x, weight, bias, rm, rv, eps, False)
    assert jnp.allclose(y_ev, ref_ev, atol=1e-4, rtol=1e-4)

    # --- non-128-multiple spatial size exercises the padding/masked-count path ---
    H2, W2 = 7, 9
    x2 = jax.random.normal(kx, (N, C, H2, W2), dtype=jnp.float32) * 1.5 - 0.3
    y2, rm2, rv2, _ = batchnorm2d_forward(
        x2, weight, bias, running_mean, running_var, num_batches_tracked,
        eps=eps, momentum=momentum, training=True,
    )
    jax.block_until_ready(y2)
    ref2 = _reference(x2, weight, bias, running_mean, running_var, eps, True)
    assert jnp.allclose(y2, ref2, atol=1e-4, rtol=1e-4)
    assert jnp.allclose(rv2, (1 - momentum) * running_var
                        + momentum * jnp.var(x2, axis=(0, 2, 3)), atol=1e-4)

    print("KERNEL_OK")
</pallas_src>

<mosaic_0001>
module attributes {stable_mosaic.version = 11 : i64} {
  func.func @_bn_stats_kernel(%arg0: i32, %arg1: i32, %arg2: memref<1x4x256xf32, #tpu.memory_space<vmem>>, %arg3: memref<4x1xf32, #tpu.memory_space<vmem>>, %arg4: memref<4x1xf32, #tpu.memory_space<vmem>>) attributes {dimension_semantics = [#tpu.dimension_semantics<arbitrary>, #tpu.dimension_semantics<arbitrary>], iteration_bounds = array<i64: 2, 1>, scalar_prefetch = 0 : i64, scratch_operands = 0 : i64, tpu.core_type = #tpu.core_type<tc>, window_params = [{transform_indices = @transform_0, window_bounds = array<i64: 1, 4, 256>}, {pipeline_mode = #tpu.pipeline_mode<synchronous>, transform_indices = @transform_1, window_bounds = array<i64: 4, 1>}, {pipeline_mode = #tpu.pipeline_mode<synchronous>, transform_indices = @transform_2, window_bounds = array<i64: 4, 1>}]} {
    %c0_i32 = arith.constant 0 : i32
    %0 = arith.cmpi eq, %arg0, %c0_i32 : i32
    %c0_i32_0 = arith.constant 0 : i32
    %1 = arith.cmpi eq, %arg1, %c0_i32_0 : i32
    %2 = arith.andi %0, %1 : i1
    %3 = arith.extui %2 : i1 to i32
    %c0_i32_1 = arith.constant 0 : i32
    %4 = arith.cmpi ne, %3, %c0_i32_1 : i32
    scf.if %4 {
      %cst_13 = arith.constant 0.000000e+00 : f32
      %18 = vector.broadcast %cst_13 : f32 to vector<4x1xf32>
      %c0_14 = arith.constant 0 : index
      %c0_15 = arith.constant 0 : index
      %19 = vector.load %arg3[%c0_14, %c0_15] : memref<4x1xf32, #tpu.memory_space<vmem>>, vector<4x1xf32>
      tpu.vector_store %arg3[%c0_14, %c0_15], %18 {strides = array<i32>} : memref<4x1xf32, #tpu.memory_space<vmem>>, vector<4x1xf32>,
      %cst_16 = arith.constant 0.000000e+00 : f32
      %20 = vector.broadcast %cst_16 : f32 to vector<4x1xf32>
      %c0_17 = arith.constant 0 : index
      %c0_18 = arith.constant 0 : index
      %21 = vector.load %arg4[%c0_17, %c0_18] : memref<4x1xf32, #tpu.memory_space<vmem>>, vector<4x1xf32>
      tpu.vector_store %arg4[%c0_17, %c0_18], %20 {strides = array<i32>} : memref<4x1xf32, #tpu.memory_space<vmem>>, vector<4x1xf32>,
    } else {
    }
    %c0 = arith.constant 0 : index
    %c0_2 = arith.constant 0 : index
    %c0_3 = arith.constant 0 : index
    %5 = vector.load %arg2[%c0, %c0_2, %c0_3] : memref<1x4x256xf32, #tpu.memory_space<vmem>>, vector<1x4x256xf32>
    %6 = vector.shape_cast %5 : vector<1x4x256xf32> to vector<4x256xf32>
    %c0_4 = arith.constant 0 : index
    %c0_5 = arith.constant 0 : index
    %7 = vector.load %arg3[%c0_4, %c0_5] : memref<4x1xf32, #tpu.memory_space<vmem>>, vector<4x1xf32>
    %cst = arith.constant dense<0.000000e+00> : vector<4xf32>
    %8 = vector.multi_reduction <add>, %6, %cst [1] : vector<4x256xf32> to vector<4xf32>
    %9 = vector.shape_cast %8 : vector<4xf32> to vector<4x1xf32>
    %10 = arith.addf %7, %9 : vector<4x1xf32>
    %c0_6 = arith.constant 0 : index
    %c0_7 = arith.constant 0 : index
    %11 = vector.load %arg3[%c0_6, %c0_7] : memref<4x1xf32, #tpu.memory_space<vmem>>, vector<4x1xf32>
    tpu.vector_store %arg3[%c0_6, %c0_7], %10 {strides = array<i32>} : memref<4x1xf32, #tpu.memory_space<vmem>>, vector<4x1xf32>,
    %c0_8 = arith.constant 0 : index
    %c0_9 = arith.constant 0 : index
    %12 = vector.load %arg4[%c0_8, %c0_9] : memref<4x1xf32, #tpu.memory_space<vmem>>, vector<4x1xf32>
    %13 = arith.mulf %6, %6 : vector<4x256xf32>
    %cst_10 = arith.constant dense<0.000000e+00> : vector<4xf32>
    %14 = vector.multi_reduction <add>, %13, %cst_10 [1] : vector<4x256xf32> to vector<4xf32>
    %15 = vector.shape_cast %14 : vector<4xf32> to vector<4x1xf32>
    %16 = arith.addf %12, %15 : vector<4x1xf32>
    %c0_11 = arith.constant 0 : index
    %c0_12 = arith.constant 0 : index
    %17 = vector.load %arg4[%c0_11, %c0_12] : memref<4x1xf32, #tpu.memory_space<vmem>>, vector<4x1xf32>
    tpu.vector_store %arg4[%c0_11, %c0_12], %16 {strides = array<i32>} : memref<4x1xf32, #tpu.memory_space<vmem>>, vector<4x1xf32>,
    return
  }
  func.func @transform_0(%arg0: i32, %arg1: i32) -> (i32, i32, i32) {
    %c0_i32 = arith.constant 0 : i32
    %c0_i32_0 = arith.constant 0 : i32
    return %arg0, %c0_i32, %arg1 : i32, i32, i32
  }
  func.func @transform_1(%arg0: i32, %arg1: i32) -> (i32, i32) {
    %c0_i32 = arith.constant 0 : i32
    %c0_i32_0 = arith.constant 0 : i32
    %c0_i32_1 = arith.constant 0 : i32
    return %c0_i32, %c0_i32_0 : i32, i32
  }
  func.func @transform_2(%arg0: i32, %arg1: i32) -> (i32, i32) {
    %c0_i32 = arith.constant 0 : i32
    %c0_i32_0 = arith.constant 0 : i32
    %c0_i32_1 = arith.constant 0 : i32
    return %c0_i32, %c0_i32_0 : i32, i32
  }
}

</mosaic_0001>

<llo_original>
// kernel: tpu_custom_call.1
$region0: #{tpu_custom_call.1}
  #allocation0 [shape = 'u32[]', space=smem, size = 0x4, offset = 0x4, fixed_abs, tag = 'smem constant byte address 0x4 - core index']
  #allocation1 [shape = 'u32[144,128]{1,0:T(1,128)}', space=vmem, size = 0x12000, scoped, tag = 'internal scratch']
  %s0 = inlined_call_operand.hbm [shape: f32[2,4,256], index: 0, kind: input, shape index: {}]
  %s1 = inlined_call_operand.vmem [shape: f32[4,1], index: 1, kind: output, shape index: {0}]
  %s2 = inlined_call_operand.vmem [shape: f32[4,1], index: 2, kind: output, shape index: {1}]
  %3 = xla_tuple %s1, %s2
  %s4 = sld [smem:[#allocation0]]
  $region53: #{tpu_custom_call.1} parent=0
    _
  %s6 = ssub.s32 1, %s4
  %s7 = scalar_select 0, %s6, %s4
  $region1: #{tpu_custom_call.1} parent=0
    #allocation2 [shape = 'u8[8192]{0}', space=vmem, size = 0x2000, scoped, tag = 'input window, operand 0']
    #allocation3 [shape = 's32[2]{0}', space=sflag, size = 0x8, scoped, tag = 'scoped memory for tpu_custom_call.1']
    %8 = vsyncpa [#allocation3], 0
    %s9 = scalar_lea.sflag [#allocation3], 1
    %10 = vsyncpa %s9, 0
    loop: start=0, step=1, limit=4
    $region2: #{tpu_custom_call.1} parent=1 // loop_pre_header
      _
    $region3: #{tpu_custom_call.1} parent=1 // loop_header
      %s12 = sphi 0, %s16
      %p13 = scmp.ge.s32.totalorder %s12, 4
      %s19 = sphi 0, %s31
      %s20 = sphi 0, %s27
      %s21 = sphi 0, %s19
      %s22 = sphi 0, %s20
      %s23 = sphi 0, %s21
      %s24 = sphi 0, %s22
      %s36 = sphi 0, %s38
      %s39 = sphi 0, %s36
      %s40 = sphi 0, %s39
      %s56 = sphi 0, %s40
      %s60 = sphi 0, %s60
      %s62 = sphi 0, %s60
      %s63 = sphi 0, %s62
      %s77 = sphi 0, %s63
      %s81 = sphi 0, %s81
      %s83 = sphi 0, %s81
      %s84 = sphi 0, %s83
      %s98 = sphi 0, %s84
    $region4: #{tpu_custom_call.1} parent=1 // loop_header_branch
      %15 = sbr.rel (%p13) target = $region8
    $region5: #{tpu_custom_call.1} parent=1 // loop_body
      %s17 = ssub.s32 %s12, 1
      %s18 = ssub.s32 %s12, 2
      %s25 = sadd.s32 1, %s20
      %p26 = scmp.ge.s32.totalorder %s25, 1
      %s27 = scalar_select %p26, 0, %s25
      %s28 = sadd.s32 1, %s19
      %s29 = scalar_select %p26, %s28, %s19
      %p30 = scmp.ge.s32.totalorder %s29, 2
      %s31 = scalar_select %p30, 0, %s29
      %s32 = ssub.s32 %s19, %s31
      %s33 = ssub.s32 %s20, %s27
      %s34 = sor.u32 %s32, %s33
      %p35 = scmp.eq.s32.totalorder %s34, 0
      %s37 = sadd.s32 %s36, 1
      %s38 = scalar_select %p35, %s36, %s37
      %p41 = pneg %p35
      %p42 = scmp.eq.s32.totalorder %s12, 1
      %p43 = por %p41, %p42
      %p44 = scmp.ne.s32.totalorder %s36, %s39
      %p45 = scmp.eq.s32.totalorder %s12, 0
      %p46 = por %p44, %p45
      %p47 = scmp.ne.s32.totalorder %s36, %s39
      %p48 = scmp.eq.s32.totalorder %s17, 1
      %p49 = por %p47, %p48
      %p50 = scmp.ne.s32.totalorder %s39, %s40
      %p51 = scmp.eq.s32.totalorder %s17, 0
      %p52 = por %p50, %p51
      %p53 = scmp.ne.s32.totalorder %s39, %s40
      %p54 = scmp.eq.s32.totalorder %s18, 1
      %p55 = por %p53, %p54
      %p57 = scmp.ne.s32.totalorder %s40, %s56
      %p58 = scmp.eq.s32.totalorder %s18, 0
      %p59 = por %p57, %p58
      %s61 = sadd.s32 %s60, 1
      %p64 = scmp.eq.s32.totalorder %s12, 1
      %p65 = scmp.ne.s32.totalorder %s60, %s62
      %p66 = scmp.eq.s32.totalorder %s12, 0
      %p67 = por %p65, %p66
      %p68 = scmp.ne.s32.totalorder %s60, %s62
      %p69 = scmp.eq.s32.totalorder %s17, 1
      %p70 = por %p68, %p69
      %p71 = scmp.ne.s32.totalorder %s62, %s63
      %p72 = scmp.eq.s32.totalorder %s17, 0
      %p73 = por %p71, %p72
      %p74 = scmp.ne.s32.totalorder %s62, %s63
      %p75 = scmp.eq.s32.totalorder %s18, 1
      %p76 = por %p74, %p75
      %p78 = scmp.ne.s32.totalorder %s63, %s77
      %p79 = scmp.eq.s32.totalorder %s18, 0
      %p80 = por %p78, %p79
      %s82 = sadd.s32 %s81, 1
      %p85 = scmp.eq.s32.totalorder %s12, 1
      %p86 = scmp.ne.s32.totalorder %s81, %s83
      %p87 = scmp.eq.s32.totalorder %s12, 0
      %p88 = por %p86, %p87
      %p89 = scmp.ne.s32.totalorder %s81, %s83
      %p90 = scmp.eq.s32.totalorder %s17, 1
      %p91 = por %p89, %p90
      %p92 = scmp.ne.s32.totalorder %s83, %s84
      %p93 = scmp.eq.s32.totalorder %s17, 0
      %p94 = por %p92, %p93
      %p95 = scmp.ne.s32.totalorder %s83, %s84
      %p96 = scmp.eq.s32.totalorder %s18, 1
      %p97 = por %p95, %p96
      %p99 = scmp.ne.s32.totalorder %s84, %s98
      %p100 = scmp.eq.s32.totalorder %s18, 0
      %p101 = por %p99, %p100
      %p102 = scmp.le.s32.totalorder 1, %s12
      %p103 = scmp.lt.s32.totalorder %s12, 3
      %p104 = pnand %p102, %p103
      %p105 = pneg %p104
      // Predicated region
      $region9: #{tpu_custom_call.1} parent=5 // pred_check
        _
      $region10: #{tpu_custom_call.1} parent=5 // pred_check_branch
        %107 = sbr.rel (%p104) target = $region12
      $region11: #{tpu_custom_call.1} parent=5 // pred_region
        %s108 = ssub.s32 %s12, 1
      $region12: #{tpu_custom_call.1} parent=5 // pred_fallthru
        _
      %p109 = scmp.lt.s32.totalorder %s12, 2
      // Predicated region
      $region13: #{tpu_custom_call.1} parent=5 // pred_check
        %p110 = pneg %p109
      $region14: #{tpu_custom_call.1} parent=5 // pred_check_branch
        %112 = sbr.rel (%p110) target = $region16
      $region15: #{tpu_custom_call.1} parent=5 // pred_region
        // Predicated region
        $region17: #{tpu_custom_call.1} parent=15 // pred_check
          %p113 = pneg %p46
        $region18: #{tpu_custom_call.1} parent=15 // pred_check_branch
          %115 = sbr.rel (%p113) target = $region20
        $region19: #{tpu_custom_call.1} parent=15 // pred_region
          %s116 = sand.u32 %s36, 1
          %s117 = scalar_lea.sflag [#allocation3], %s116
          %s118 = sand.u32 %s36, 1
          %s119 = smul.addr %s118, 8
          %s120 = scalar_lea.vmem [#allocation2], %s119
          %s121 = smul.u32 2, %s20
          %s123 = ssub.s32 128, 128
          %124 = vsyncadd %s117, %s123
          %s125 = smul.addr %s19, 2
          %s126 = sadd.s32 %s121, %s125
          %s127 = smul.addr %s126, 64
          %s128 = scalar_lea.hbm %s0, %s127
          %s130 = sshll.u32 %s120, 4
          %s131 = int_to_ptr.vmem [resolvable:$true] %s130
          %133 = dma.hbm_to_vmem [thread:$0]  %s128, 128, %s131, %s117
        $region20: #{tpu_custom_call.1} parent=15 // pred_fallthru
          _
      $region16: #{tpu_custom_call.1} parent=5 // pred_fallthru
        _
      %p134 = scmp.le.s32.totalorder 1, %s12
      %p135 = scmp.lt.s32.totalorder %s12, 3
      %p136 = pnand %p134, %p135
      %p137 = pneg %p136
      // Predicated region
      $region21: #{tpu_custom_call.1} parent=5 // pred_check
        _
      $region22: #{tpu_custom_call.1} parent=5 // pred_check_branch
        %139 = sbr.rel (%p136) target = $region24
      $region23: #{tpu_custom_call.1} parent=5 // pred_region
        %s140 = ssub.s32 %s12, 1
        %s141 = sand.u32 %s39, 1
        %s142 = scalar_lea.sflag [#allocation3], %s141
        %s143 = sand.u32 %s39, 1
        %s144 = smul.addr %s143, 8
        %s145 = scalar_lea.vmem [#allocation2], %s144
        // Predicated region
        $region25: #{tpu_custom_call.1} parent=23 // pred_check
          %p146 = pneg %p52
        $region26: #{tpu_custom_call.1} parent=23 // pred_check_branch
          %148 = sbr.rel (%p146) target = $region28
        $region27: #{tpu_custom_call.1} parent=23 // pred_region
          %149 = dma.done %s142, 128
        $region28: #{tpu_custom_call.1} parent=23 // pred_fallthru
          _
        %s150 = sand.u32 %s39, 1
        %s151 = scalar_lea.sflag [#allocation3], %s150
        %s152 = sand.u32 %s39, 1
        %s153 = smul.addr %s152, 8
        %s154 = scalar_lea.vmem [#allocation2], %s153
        %p155 = pneg %p52
        %p156 = pneg %p49
        %p157 = pneg %p73
        %p158 = pneg %p70
        %p159 = pneg %p94
        %p160 = pneg %p91
        %s161 = smul.u32 2, %s22
        %p162 = scmp.eq.s32.totalorder %s21, 0
        %p163 = scmp.eq.s32.totalorder %s22, 0
        %p164 = pnand %p162, %p163
        %p165 = pneg %p164
        // Predicated region
        $region29: #{tpu_custom_call.1} parent=23 // pred_check
          _
        $region30: #{tpu_custom_call.1} parent=23 // pred_check_branch
          %167 = sbr.rel (%p164) target = $region32
        $region31: #{tpu_custom_call.1} parent=23 // pred_region
          %vm168 = vcmask 3072
          %169 = vst.msk [vmem:[%s1] sm:$0xf] %vm168, 0.0
          %170 = vst.msk [vmem:[%s2] sm:$0xf] %vm168, 0.0
        $region32: #{tpu_custom_call.1} parent=23 // pred_fallthru
          _
        %v171 = vld [vmem:[%s145] sm:$0xff]
        %v172 = vld [vmem:[%s1] sm:$0xf]
        %v174 = vcombine.high %v171, %v171
        %vm176 = vcmask 1043456
        %v177 = vsel %vm176, %v171, 0.0
        %v178 = vsel %vm176, %v174, 0.0
        %v179 = vadd.f32 %v177, %v178
        %180 = vadd.xlane.f32.xlu0 %v179
        %v181 = vpop.xlane.xlu0 %180
        %v182 = vadd.f32 %v172, %v181
        %vm183 = vcmask 3072
        %184 = vst.msk [vmem:[%s1] sm:$0xf] %vm183, %v182
        %v185 = vld [vmem:[%s2] sm:$0xf]
        %v186 = vmul.f32 %v171, %v171
        %v188 = vcombine.high %v186, %v186
        %v190 = vsel %vm176, %v186, 0.0
        %v191 = vsel %vm176, %v188, 0.0
        %v192 = vadd.f32 %v190, %v191
        %193 = vadd.xlane.f32.xlu0 %v192
        %v194 = vpop.xlane.xlu0 %193
        %v195 = vadd.f32 %v185, %v194
        %196 = vst.msk [vmem:[%s2] sm:$0xf] %vm183, %v195
        // Predicated region
        $region33: #{tpu_custom_call.1} parent=23 // pred_check
          %p197 = pneg %p70
        $region34: #{tpu_custom_call.1} parent=23 // pred_check_branch
          %199 = sbr.rel (%p197) target = $region36
        $region35: #{tpu_custom_call.1} parent=23 // pred_region
          _
        $region36: #{tpu_custom_call.1} parent=23 // pred_fallthru
          _
        // Predicated region
        $region37: #{tpu_custom_call.1} parent=23 // pred_check
          %p200 = pneg %p91
        $region38: #{tpu_custom_call.1} parent=23 // pred_check_branch
          %202 = sbr.rel (%p200) target = $region40
        $region39: #{tpu_custom_call.1} parent=23 // pred_region
          _
        $region40: #{tpu_custom_call.1} parent=23 // pred_fallthru
          _
        // Predicated region
        $region41: #{tpu_custom_call.1} parent=23 // pred_check
          %p203 = pneg %p70
        $region42: #{tpu_custom_call.1} parent=23 // pred_check_branch
          %205 = sbr.rel (%p203) target = $region44
        $region43: #{tpu_custom_call.1} parent=23 // pred_region
          _
        $region44: #{tpu_custom_call.1} parent=23 // pred_fallthru
          _
        // Predicated region
        $region45: #{tpu_custom_call.1} parent=23 // pred_check
          %p206 = pneg %p91
        $region46: #{tpu_custom_call.1} parent=23 // pred_check_branch
          %208 = sbr.rel (%p206) target = $region48
        $region47: #{tpu_custom_call.1} parent=23 // pred_region
          _
        $region48: #{tpu_custom_call.1} parent=23 // pred_fallthru
          _
      $region24: #{tpu_custom_call.1} parent=5 // pred_fallthru
        _
      %p209 = scmp.le.s32.totalorder 2, %s12
      // Predicated region
      $region49: #{tpu_custom_call.1} parent=5 // pred_check
        %p210 = pneg %p209
      $region50: #{tpu_custom_call.1} parent=5 // pred_check_branch
        %212 = sbr.rel (%p210) target = $region52
      $region51: #{tpu_custom_call.1} parent=5 // pred_region
        %s213 = ssub.s32 %s12, 2
      $region52: #{tpu_custom_call.1} parent=5 // pred_fallthru
        _
    $region6: #{tpu_custom_call.1} parent=1 // loop_footer
      %s16 = sadd.s32 1, %s12
    $region7: #{tpu_custom_call.1} parent=1 // loop_footer_branch
      %11 = sbr.rel target = $region3
    $region8: #{tpu_custom_call.1} parent=1 // loop_exit
      _
    %214 = vsyncpa [#allocation3], 1
    %s215 = scalar_lea.sflag [#allocation3], 1
    %216 = vsyncpa %s215, 1

</llo_original>
